<compile_context>
chip_gen: v6e
topology: v6e:2x2x1
jax: 0.10.0
libtpu: 0.0.40
codegen_flags: <defaults>
</compile_context>

<pallas_src>
import functools

import jax
import jax.numpy as jnp
from jax.experimental import pallas as pl
from jax.experimental.pallas import tpu as pltpu


def _mlp_kernel(*refs):
    """Fused N-layer MLP on a transposed (features, batch-tile) block.

    refs = (x_ref, w1_ref, b1_ref, ..., wL_ref, bL_ref, o_ref)
      x_ref : (in_size, bb)  compute dtype (bf16)
      wl_ref: (out_l, in_l)  compute dtype (PyTorch (out, in) layout)
      bl_ref: (out_l, 1)     f32
      o_ref : (out_size, bb) f32
    """
    x_ref, *wb_refs, o_ref = refs
    n_layers = len(wb_refs) // 2
    cdt = wb_refs[0].dtype            # MXU operand dtype (bf16), f32 accumulation

    h = x_ref[...]                    # already compute dtype (cast fused in wrapper)
    for l in range(n_layers):
        w = wb_refs[2 * l][...]
        b = wb_refs[2 * l + 1][...]   # (out_l, 1) f32, broadcasts along lanes
        h = jnp.dot(w, h.astype(cdt), preferred_element_type=jnp.float32) + b
        if l < n_layers - 1:
            h = jnp.maximum(h, 0.0)   # ReLU (f32 on the VPU; hidden under the MXU)
        # TODO(synk): Dropout(p=drop_rate=0) after hidden layer 2 is identity at
        # inference, so it is intentionally omitted.
    o_ref[...] = h.astype(o_ref.dtype)


def _choose_block_b(B, requested):
    """Batch tile on the lane axis: must be a multiple of 128 or equal to B."""
    if B <= 256:
        return B                                   # one full-array block (legal)
    if B <= requested:
        # Two balanced, 128-aligned halves: keeps both v7x TensorCores busy via
        # the "parallel" grid axis; on single-TC v5e/v6e the extra step boundary
        # (~0.35 us) is negligible at these tile sizes.
        half = -(-B // 2)
        return min(B, -(-half // 128) * 128)
    # Large batch: big 128-aligned tiles to amortize per-step overhead.
    return max(128, (requested // 128) * 128)


@functools.partial(jax.jit, static_argnames=("block_b", "compute_dtype"))
def mlp_forward(x, params, *, block_b=2048, compute_dtype=jnp.bfloat16):
    """x: (B, input_size) f32. params: list of (W, b), W=(out, in), b=(out, 1)."""
    B, in_size = x.shape
    out_size = params[-1][0].shape[0]

    bb = _choose_block_b(B, block_b)
    grid = (pl.cdiv(B, bb),)

    # Batch-on-lanes: stream x transposed; the transpose + bf16 cast fuse into
    # a single XLA pass, and the kernel then reads lane-dense bf16 rows.
    x_t = jnp.transpose(x).astype(compute_dtype)          # (in_size, B)

    in_specs = [pl.BlockSpec((in_size, bb), lambda i: (0, i))]
    flat_params = []
    for (w, b) in params:
        # No-ops when the caller already pre-cast (preferred); kept for safety.
        w = w if w.dtype == compute_dtype else w.astype(compute_dtype)
        b = b if b.dtype == jnp.float32 else b.astype(jnp.float32)
        flat_params += [w, b]
        # Whole-array VMEM residency: DMA'd once per launch, not per grid step.
        in_specs += [pl.BlockSpec(memory_space=pltpu.MemorySpace.VMEM)] * 2

    out_t = pl.pallas_call(
        _mlp_kernel,
        out_shape=jax.ShapeDtypeStruct((out_size, B), jnp.float32),
        grid_spec=pltpu.PrefetchScalarGridSpec(
            num_scalar_prefetch=0,
            grid=grid,
            in_specs=in_specs,
            out_specs=pl.BlockSpec((out_size, bb), lambda i: (0, i)),
        ),
        compiler_params=pltpu.CompilerParams(
            dimension_semantics=("parallel",),   # batch axis -> megacore on v7x
            vmem_limit_bytes=32 * 1024 * 1024,   # headroom over v5e's 16 MiB default
        ),
    )(x_t, *flat_params)

    return jnp.transpose(out_t)                            # (B, out_size)


def init_params(key, input_size, hidden, output_size):
    """Deterministic init mimicking nn.Linear's uniform(-1/sqrt(fan_in), +).

    Weights are stored in PyTorch (out_features, in_features) layout; biases
    as (out_features, 1) so they broadcast along the lane (batch) axis.
    """
    sizes = [input_size] + list(hidden) + [output_size]
    params = []
    for fan_in, fan_out in zip(sizes[:-1], sizes[1:]):
        key, kw, kb = jax.random.split(key, 3)
        bound = 1.0 / jnp.sqrt(jnp.float32(fan_in))
        w = jax.random.uniform(kw, (fan_out, fan_in), jnp.float32, -bound, bound)
        b = jax.random.uniform(kb, (fan_out, 1), jnp.float32, -bound, bound)
        params.append((w, b))
    return params


def mlp_reference(x, params, compute_dtype=jnp.float32):
    """Pure-JAX reference in the natural (B, features) layout."""
    h = x.astype(compute_dtype)
    for i, (w, b) in enumerate(params):
        h = (jnp.dot(h, jnp.transpose(w).astype(compute_dtype),
                     preferred_element_type=jnp.float32)
             + jnp.transpose(b).astype(jnp.float32))
        if i < len(params) - 1:
            h = jnp.maximum(h, 0.0).astype(compute_dtype)
    return h


if __name__ == "__main__":
    input_size = 16
    hidden = [32, 32, 32]
    output_size = 8

    key = jax.random.PRNGKey(0)
    kx, kp = jax.random.split(key)
    params = init_params(kp, input_size, hidden, output_size)
    # Pre-cast weights to the MXU operand dtype once, outside the per-call path
    # (biases stay f32 for the f32 bias/ReLU epilogue).
    params_c = [(w.astype(jnp.bfloat16), b) for (w, b) in params]

    # 512: two balanced 128-aligned blocks; 300: ragged tail block (masked
    # writeback); 20: single full-array (non-128-multiple) block.
    for batch in (512, 300, 20):
        x = jax.random.normal(jax.random.fold_in(kx, batch),
                              (batch, input_size), jnp.float32)
        y = mlp_forward(x, params_c)
        jax.block_until_ready(y)
        assert y.shape == (batch, output_size)

        # Same-precision reference (bf16 operands, f32 accumulation).
        y_ref = mlp_reference(x, params, compute_dtype=jnp.bfloat16)
        assert jnp.allclose(y, y_ref, atol=5e-3, rtol=5e-3), (
            f"bf16 reference mismatch at batch={batch}")

        # Loose sanity check against the full-f32 PyTorch-equivalent math.
        y_ref_f32 = mlp_reference(x, params, compute_dtype=jnp.float32)
        assert jnp.allclose(y, y_ref_f32, atol=1e-1, rtol=5e-2), (
            f"f32 reference mismatch at batch={batch}")

    print("KERNEL_OK")
</pallas_src>

<mosaic_0001>
module attributes {stable_mosaic.version = 11 : i64} {
  func.func @_mlp_kernel(%arg0: i32, %arg1: memref<16x256xbf16, #tpu.memory_space<vmem>>, %arg2: memref<32x16xbf16, #tpu.memory_space<vmem>>, %arg3: memref<32x1xf32, #tpu.memory_space<vmem>>, %arg4: memref<32x32xbf16, #tpu.memory_space<vmem>>, %arg5: memref<32x1xf32, #tpu.memory_space<vmem>>, %arg6: memref<32x32xbf16, #tpu.memory_space<vmem>>, %arg7: memref<32x1xf32, #tpu.memory_space<vmem>>, %arg8: memref<8x32xbf16, #tpu.memory_space<vmem>>, %arg9: memref<8x1xf32, #tpu.memory_space<vmem>>, %arg10: memref<8x256xf32, #tpu.memory_space<vmem>>) attributes {dimension_semantics = [#tpu.dimension_semantics<parallel>], iteration_bounds = array<i64: 2>, scalar_prefetch = 0 : i64, scratch_operands = 0 : i64, tpu.core_type = #tpu.core_type<tc>, window_params = [{transform_indices = @transform_0, window_bounds = array<i64: 16, 256>}, {pipeline_mode = #tpu.pipeline_mode<synchronous>, transform_indices = @transform_1, window_bounds = array<i64: 32, 16>}, {pipeline_mode = #tpu.pipeline_mode<synchronous>, transform_indices = @transform_2, window_bounds = array<i64: 32, 1>}, {pipeline_mode = #tpu.pipeline_mode<synchronous>, transform_indices = @transform_3, window_bounds = array<i64: 32, 32>}, {pipeline_mode = #tpu.pipeline_mode<synchronous>, transform_indices = @transform_4, window_bounds = array<i64: 32, 1>}, {pipeline_mode = #tpu.pipeline_mode<synchronous>, transform_indices = @transform_5, window_bounds = array<i64: 32, 32>}, {pipeline_mode = #tpu.pipeline_mode<synchronous>, transform_indices = @transform_6, window_bounds = array<i64: 32, 1>}, {pipeline_mode = #tpu.pipeline_mode<synchronous>, transform_indices = @transform_7, window_bounds = array<i64: 8, 32>}, {pipeline_mode = #tpu.pipeline_mode<synchronous>, transform_indices = @transform_8, window_bounds = array<i64: 8, 1>}, {transform_indices = @transform_9, window_bounds = array<i64: 8, 256>}]} {
    %c0 = arith.constant 0 : index
    %c0_0 = arith.constant 0 : index
    %0 = vector.load %arg1[%c0, %c0_0] : memref<16x256xbf16, #tpu.memory_space<vmem>>, vector<16x256xbf16>
    %c0_1 = arith.constant 0 : index
    %c0_2 = arith.constant 0 : index
    %1 = vector.load %arg2[%c0_1, %c0_2] : memref<32x16xbf16, #tpu.memory_space<vmem>>, vector<32x16xbf16>
    %c0_3 = arith.constant 0 : index
    %c0_4 = arith.constant 0 : index
    %2 = vector.load %arg3[%c0_3, %c0_4] : memref<32x1xf32, #tpu.memory_space<vmem>>, vector<32x1xf32>
    %cst = arith.constant dense<0.000000e+00> : vector<32x256xf32>
    %3 = tpu.matmul %1, %0, %cst {dimension_numbers = #tpu.dot_dimension_numbers<[1], [0], [0], [1], [0, 0, 1, 1], [], []>} : vector<32x16xbf16>, vector<16x256xbf16>, vector<32x256xf32> -> vector<32x256xf32>
    %4 = vector.broadcast %2 : vector<32x1xf32> to vector<32x256xf32>
    %5 = arith.addf %3, %4 : vector<32x256xf32>
    %cst_5 = arith.constant 0.000000e+00 : f32
    %6 = vector.broadcast %cst_5 : f32 to vector<32x256xf32>
    %7 = arith.maximumf %5, %6 : vector<32x256xf32>
    %c0_6 = arith.constant 0 : index
    %c0_7 = arith.constant 0 : index
    %8 = vector.load %arg4[%c0_6, %c0_7] : memref<32x32xbf16, #tpu.memory_space<vmem>>, vector<32x32xbf16>
    %c0_8 = arith.constant 0 : index
    %c0_9 = arith.constant 0 : index
    %9 = vector.load %arg5[%c0_8, %c0_9] : memref<32x1xf32, #tpu.memory_space<vmem>>, vector<32x1xf32>
    %10 = arith.truncf %7 : vector<32x256xf32> to vector<32x256xbf16>
    %cst_10 = arith.constant dense<0.000000e+00> : vector<32x256xf32>
    %11 = tpu.matmul %8, %10, %cst_10 {dimension_numbers = #tpu.dot_dimension_numbers<[1], [0], [0], [1], [0, 0, 1, 1], [], []>} : vector<32x32xbf16>, vector<32x256xbf16>, vector<32x256xf32> -> vector<32x256xf32>
    %12 = vector.broadcast %9 : vector<32x1xf32> to vector<32x256xf32>
    %13 = arith.addf %11, %12 : vector<32x256xf32>
    %cst_11 = arith.constant 0.000000e+00 : f32
    %14 = vector.broadcast %cst_11 : f32 to vector<32x256xf32>
    %15 = arith.maximumf %13, %14 : vector<32x256xf32>
    %c0_12 = arith.constant 0 : index
    %c0_13 = arith.constant 0 : index
    %16 = vector.load %arg6[%c0_12, %c0_13] : memref<32x32xbf16, #tpu.memory_space<vmem>>, vector<32x32xbf16>
    %c0_14 = arith.constant 0 : index
    %c0_15 = arith.constant 0 : index
    %17 = vector.load %arg7[%c0_14, %c0_15] : memref<32x1xf32, #tpu.memory_space<vmem>>, vector<32x1xf32>
    %18 = arith.truncf %15 : vector<32x256xf32> to vector<32x256xbf16>
    %cst_16 = arith.constant dense<0.000000e+00> : vector<32x256xf32>
    %19 = tpu.matmul %16, %18, %cst_16 {dimension_numbers = #tpu.dot_dimension_numbers<[1], [0], [0], [1], [0, 0, 1, 1], [], []>} : vector<32x32xbf16>, vector<32x256xbf16>, vector<32x256xf32> -> vector<32x256xf32>
    %20 = vector.broadcast %17 : vector<32x1xf32> to vector<32x256xf32>
    %21 = arith.addf %19, %20 : vector<32x256xf32>
    %cst_17 = arith.constant 0.000000e+00 : f32
    %22 = vector.broadcast %cst_17 : f32 to vector<32x256xf32>
    %23 = arith.maximumf %21, %22 : vector<32x256xf32>
    %c0_18 = arith.constant 0 : index
    %c0_19 = arith.constant 0 : index
    %24 = vector.load %arg8[%c0_18, %c0_19] : memref<8x32xbf16, #tpu.memory_space<vmem>>, vector<8x32xbf16>
    %c0_20 = arith.constant 0 : index
    %c0_21 = arith.constant 0 : index
    %25 = vector.load %arg9[%c0_20, %c0_21] : memref<8x1xf32, #tpu.memory_space<vmem>>, vector<8x1xf32>
    %26 = arith.truncf %23 : vector<32x256xf32> to vector<32x256xbf16>
    %cst_22 = arith.constant dense<0.000000e+00> : vector<8x256xf32>
    %27 = tpu.matmul %24, %26, %cst_22 {dimension_numbers = #tpu.dot_dimension_numbers<[1], [0], [0], [1], [0, 0, 1, 1], [], []>} : vector<8x32xbf16>, vector<32x256xbf16>, vector<8x256xf32> -> vector<8x256xf32>
    %28 = vector.broadcast %25 : vector<8x1xf32> to vector<8x256xf32>
    %29 = arith.addf %27, %28 : vector<8x256xf32>
    %c0_23 = arith.constant 0 : index
    %c0_24 = arith.constant 0 : index
    %30 = vector.load %arg10[%c0_23, %c0_24] : memref<8x256xf32, #tpu.memory_space<vmem>>, vector<8x256xf32>
    tpu.vector_store %arg10[%c0_23, %c0_24], %29 {strides = array<i32>} : memref<8x256xf32, #tpu.memory_space<vmem>>, vector<8x256xf32>,
    return
  }
  func.func @transform_0(%arg0: i32) -> (i32, i32) {
    %c0_i32 = arith.constant 0 : i32
    %c0_i32_0 = arith.constant 0 : i32
    return %c0_i32, %arg0 : i32, i32
  }
  func.func @transform_1(%arg0: i32) -> (i32, i32) {
    %c0_i32 = arith.constant 0 : i32
    %c0_i32_0 = arith.constant 0 : i32
    %c0_i32_1 = arith.constant 0 : i32
    return %c0_i32, %c0_i32_0 : i32, i32
  }
  func.func @transform_2(%arg0: i32) -> (i32, i32) {
    %c0_i32 = arith.constant 0 : i32
    %c0_i32_0 = arith.constant 0 : i32
    %c0_i32_1 = arith.constant 0 : i32
    return %c0_i32, %c0_i32_0 : i32, i32
  }
  func.func @transform_3(%arg0: i32) -> (i32, i32) {
    %c0_i32 = arith.constant 0 : i32
    %c0_i32_0 = arith.constant 0 : i32
    %c0_i32_1 = arith.constant 0 : i32
    return %c0_i32, %c0_i32_0 : i32, i32
  }
  func.func @transform_4(%arg0: i32) -> (i32, i32) {
    %c0_i32 = arith.constant 0 : i32
    %c0_i32_0 = arith.constant 0 : i32
    %c0_i32_1 = arith.constant 0 : i32
    return %c0_i32, %c0_i32_0 : i32, i32
  }
  func.func @transform_5(%arg0: i32) -> (i32, i32) {
    %c0_i32 = arith.constant 0 : i32
    %c0_i32_0 = arith.constant 0 : i32
    %c0_i32_1 = arith.constant 0 : i32
    return %c0_i32, %c0_i32_0 : i32, i32
  }
  func.func @transform_6(%arg0: i32) -> (i32, i32) {
    %c0_i32 = arith.constant 0 : i32
    %c0_i32_0 = arith.constant 0 : i32
    %c0_i32_1 = arith.constant 0 : i32
    return %c0_i32, %c0_i32_0 : i32, i32
  }
  func.func @transform_7(%arg0: i32) -> (i32, i32) {
    %c0_i32 = arith.constant 0 : i32
    %c0_i32_0 = arith.constant 0 : i32
    %c0_i32_1 = arith.constant 0 : i32
    return %c0_i32, %c0_i32_0 : i32, i32
  }
  func.func @transform_8(%arg0: i32) -> (i32, i32) {
    %c0_i32 = arith.constant 0 : i32
    %c0_i32_0 = arith.constant 0 : i32
    %c0_i32_1 = arith.constant 0 : i32
    return %c0_i32, %c0_i32_0 : i32, i32
  }
  func.func @transform_9(%arg0: i32) -> (i32, i32) {
    %c0_i32 = arith.constant 0 : i32
    %c0_i32_0 = arith.constant 0 : i32
    return %c0_i32, %arg0 : i32, i32
  }
}

</mosaic_0001>

<llo_original>
// kernel: mlp_forward.1
$region0: #{mlp_forward.1}
  #allocation0 [shape = 'u32[]', space=smem, size = 0x4, offset = 0x4, fixed_abs, tag = 'smem constant byte address 0x4 - core index']
  #allocation1 [shape = 'u32[144,128]{1,0:T(1,128)}', space=vmem, size = 0x12000, scoped, tag = 'internal scratch']
  %s0 = inlined_call_operand.vmem [shape: bf16[16,512], index: 0, kind: input, shape index: {}]
  %s1 = inlined_call_operand.vmem [shape: bf16[32,16], index: 1, kind: input, shape index: {}]
  %s2 = inlined_call_operand.vmem [shape: f32[32,1], index: 2, kind: input, shape index: {}]
  %s3 = inlined_call_operand.vmem [shape: bf16[32,32], index: 3, kind: input, shape index: {}]
  %s4 = inlined_call_operand.vmem [shape: f32[32,1], index: 4, kind: input, shape index: {}]
  %s5 = inlined_call_operand.vmem [shape: bf16[32,32], index: 5, kind: input, shape index: {}]
  %s6 = inlined_call_operand.vmem [shape: f32[32,1], index: 6, kind: input, shape index: {}]
  %s7 = inlined_call_operand.vmem [shape: bf16[8,32], index: 7, kind: input, shape index: {}]
  %s8 = inlined_call_operand.vmem [shape: f32[8,1], index: 8, kind: input, shape index: {}]
  %s9 = inlined_call_operand.hbm [shape: f32[8,512], index: 9, kind: output, shape index: {}]
  %s10 = sld [smem:[#allocation0]]
  $region107: #{mlp_forward.1} parent=0
    _
  %s12 = ssub.s32 1, %s10
  %s13 = scalar_select 0, %s12, %s10
  $region1: #{mlp_forward.1} parent=0
    #allocation2 [shape = 'u8[16384]{0}', space=vmem, size = 0x4000, scoped, tag = 'input window, operand 0']
    #allocation3 [shape = 'u8[16384]{0}', space=vmem, size = 0x4000, scoped, tag = 'output window, operand 0']
    #allocation4 [shape = 's32[2]{0}', space=sflag, size = 0x8, scoped, tag = 'scoped memory for mlp_forward.1']
    %14 = vsyncpa [#allocation4], 0
    %s15 = scalar_lea.sflag [#allocation4], 1
    %16 = vsyncpa %s15, 0
    loop: start=0, step=1, limit=4
    $region2: #{mlp_forward.1} parent=1 // loop_pre_header
      _
    $region3: #{mlp_forward.1} parent=1 // loop_header
      %s18 = sphi 0, %s22
      %p19 = scmp.ge.s32.totalorder %s18, 4
      %s28 = sphi 0, %s30
      %s31 = sphi 0, %s28
      %s32 = sphi 0, %s31
      %s48 = sphi 0, %s32
      %s52 = sphi 0, %s52
      %s54 = sphi 0, %s52
      %s55 = sphi 0, %s54
      %s69 = sphi 0, %s55
      %s73 = sphi 0, %s73
      %s75 = sphi 0, %s73
      %s76 = sphi 0, %s75
      %s90 = sphi 0, %s76
      %s94 = sphi 0, %s94
      %s96 = sphi 0, %s94
      %s97 = sphi 0, %s96
      %s111 = sphi 0, %s97
      %s115 = sphi 0, %s115
      %s117 = sphi 0, %s115
      %s118 = sphi 0, %s117
      %s132 = sphi 0, %s118
      %s136 = sphi 0, %s136
      %s138 = sphi 0, %s136
      %s139 = sphi 0, %s138
      %s153 = sphi 0, %s139
      %s157 = sphi 0, %s157
      %s159 = sphi 0, %s157
      %s160 = sphi 0, %s159
      %s174 = sphi 0, %s160
      %s178 = sphi 0, %s178
      %s180 = sphi 0, %s178
      %s181 = sphi 0, %s180
      %s195 = sphi 0, %s181
      %s199 = sphi 0, %s199
      %s201 = sphi 0, %s199
      %s202 = sphi 0, %s201
      %s216 = sphi 0, %s202
      %s222 = sphi 0, %s224
      %s225 = sphi 0, %s222
      %s226 = sphi 0, %s225
      %s242 = sphi 0, %s226
    $region4: #{mlp_forward.1} parent=1 // loop_header_branch
      %21 = sbr.rel (%p19) target = $region8
    $region5: #{mlp_forward.1} parent=1 // loop_body
      %s23 = ssub.s32 %s18, 1
      %s24 = ssub.s32 %s18, 2
      %s25 = sadd.s32 %s18, 1
      %s26 = ssub.s32 %s18, %s25
      %p27 = scmp.eq.s32.totalorder %s26, 0
      %s29 = sadd.s32 %s28, 1
      %s30 = scalar_select %p27, %s28, %s29
      %p33 = pneg %p27
      %p34 = scmp.eq.s32.totalorder %s18, 1
      %p35 = por %p33, %p34
      %p36 = scmp.ne.s32.totalorder %s28, %s31
      %p37 = scmp.eq.s32.totalorder %s18, 0
      %p38 = por %p36, %p37
      %p39 = scmp.ne.s32.totalorder %s28, %s31
      %p40 = scmp.eq.s32.totalorder %s23, 1
      %p41 = por %p39, %p40
      %p42 = scmp.ne.s32.totalorder %s31, %s32
      %p43 = scmp.eq.s32.totalorder %s23, 0
      %p44 = por %p42, %p43
      %p45 = scmp.ne.s32.totalorder %s31, %s32
      %p46 = scmp.eq.s32.totalorder %s24, 1
      %p47 = por %p45, %p46
      %p49 = scmp.ne.s32.totalorder %s32, %s48
      %p50 = scmp.eq.s32.totalorder %s24, 0
      %p51 = por %p49, %p50
      %s53 = sadd.s32 %s52, 1
      %p56 = scmp.eq.s32.totalorder %s18, 1
      %p57 = scmp.ne.s32.totalorder %s52, %s54
      %p58 = scmp.eq.s32.totalorder %s18, 0
      %p59 = por %p57, %p58
      %p60 = scmp.ne.s32.totalorder %s52, %s54
      %p61 = scmp.eq.s32.totalorder %s23, 1
      %p62 = por %p60, %p61
      %p63 = scmp.ne.s32.totalorder %s54, %s55
      %p64 = scmp.eq.s32.totalorder %s23, 0
      %p65 = por %p63, %p64
      %p66 = scmp.ne.s32.totalorder %s54, %s55
      %p67 = scmp.eq.s32.totalorder %s24, 1
      %p68 = por %p66, %p67
      %p70 = scmp.ne.s32.totalorder %s55, %s69
      %p71 = scmp.eq.s32.totalorder %s24, 0
      %p72 = por %p70, %p71
      %s74 = sadd.s32 %s73, 1
      %p77 = scmp.eq.s32.totalorder %s18, 1
      %p78 = scmp.ne.s32.totalorder %s73, %s75
      %p79 = scmp.eq.s32.totalorder %s18, 0
      %p80 = por %p78, %p79
      %p81 = scmp.ne.s32.totalorder %s73, %s75
      %p82 = scmp.eq.s32.totalorder %s23, 1
      %p83 = por %p81, %p82
      %p84 = scmp.ne.s32.totalorder %s75, %s76
      %p85 = scmp.eq.s32.totalorder %s23, 0
      %p86 = por %p84, %p85
      %p87 = scmp.ne.s32.totalorder %s75, %s76
      %p88 = scmp.eq.s32.totalorder %s24, 1
      %p89 = por %p87, %p88
      %p91 = scmp.ne.s32.totalorder %s76, %s90
      %p92 = scmp.eq.s32.totalorder %s24, 0
      %p93 = por %p91, %p92
      %s95 = sadd.s32 %s94, 1
      %p98 = scmp.eq.s32.totalorder %s18, 1
      %p99 = scmp.ne.s32.totalorder %s94, %s96
      %p100 = scmp.eq.s32.totalorder %s18, 0
      %p101 = por %p99, %p100
      %p102 = scmp.ne.s32.totalorder %s94, %s96
      %p103 = scmp.eq.s32.totalorder %s23, 1
      %p104 = por %p102, %p103
      %p105 = scmp.ne.s32.totalorder %s96, %s97
      %p106 = scmp.eq.s32.totalorder %s23, 0
      %p107 = por %p105, %p106
      %p108 = scmp.ne.s32.totalorder %s96, %s97
      %p109 = scmp.eq.s32.totalorder %s24, 1
      %p110 = por %p108, %p109
      %p112 = scmp.ne.s32.totalorder %s97, %s111
      %p113 = scmp.eq.s32.totalorder %s24, 0
      %p114 = por %p112, %p113
      %s116 = sadd.s32 %s115, 1
      %p119 = scmp.eq.s32.totalorder %s18, 1
      %p120 = scmp.ne.s32.totalorder %s115, %s117
      %p121 = scmp.eq.s32.totalorder %s18, 0
      %p122 = por %p120, %p121
      %p123 = scmp.ne.s32.totalorder %s115, %s117
      %p124 = scmp.eq.s32.totalorder %s23, 1
      %p125 = por %p123, %p124
      %p126 = scmp.ne.s32.totalorder %s117, %s118
      %p127 = scmp.eq.s32.totalorder %s23, 0
      %p128 = por %p126, %p127
      %p129 = scmp.ne.s32.totalorder %s117, %s118
      %p130 = scmp.eq.s32.totalorder %s24, 1
      %p131 = por %p129, %p130
      %p133 = scmp.ne.s32.totalorder %s118, %s132
      %p134 = scmp.eq.s32.totalorder %s24, 0
      %p135 = por %p133, %p134
      %s137 = sadd.s32 %s136, 1
      %p140 = scmp.eq.s32.totalorder %s18, 1
      %p141 = scmp.ne.s32.totalorder %s136, %s138
      %p142 = scmp.eq.s32.totalorder %s18, 0
      %p143 = por %p141, %p142
      %p144 = scmp.ne.s32.totalorder %s136, %s138
      %p145 = scmp.eq.s32.totalorder %s23, 1
      %p146 = por %p144, %p145
      %p147 = scmp.ne.s32.totalorder %s138, %s139
      %p148 = scmp.eq.s32.totalorder %s23, 0
      %p149 = por %p147, %p148
      %p150 = scmp.ne.s32.totalorder %s138, %s139
      %p151 = scmp.eq.s32.totalorder %s24, 1
      %p152 = por %p150, %p151
      %p154 = scmp.ne.s32.totalorder %s139, %s153
      %p155 = scmp.eq.s32.totalorder %s24, 0
      %p156 = por %p154, %p155
      %s158 = sadd.s32 %s157, 1
      %p161 = scmp.eq.s32.totalorder %s18, 1
      %p162 = scmp.ne.s32.totalorder %s157, %s159
      %p163 = scmp.eq.s32.totalorder %s18, 0
      %p164 = por %p162, %p163
      %p165 = scmp.ne.s32.totalorder %s157, %s159
      %p166 = scmp.eq.s32.totalorder %s23, 1
      %p167 = por %p165, %p166
      %p168 = scmp.ne.s32.totalorder %s159, %s160
      %p169 = scmp.eq.s32.totalorder %s23, 0
      %p170 = por %p168, %p169
      %p171 = scmp.ne.s32.totalorder %s159, %s160
      %p172 = scmp.eq.s32.totalorder %s24, 1
      %p173 = por %p171, %p172
      %p175 = scmp.ne.s32.totalorder %s160, %s174
      %p176 = scmp.eq.s32.totalorder %s24, 0
      %p177 = por %p175, %p176
      %s179 = sadd.s32 %s178, 1
      %p182 = scmp.eq.s32.totalorder %s18, 1
      %p183 = scmp.ne.s32.totalorder %s178, %s180
      %p184 = scmp.eq.s32.totalorder %s18, 0
      %p185 = por %p183, %p184
      %p186 = scmp.ne.s32.totalorder %s178, %s180
      %p187 = scmp.eq.s32.totalorder %s23, 1
      %p188 = por %p186, %p187
      %p189 = scmp.ne.s32.totalorder %s180, %s181
      %p190 = scmp.eq.s32.totalorder %s23, 0
      %p191 = por %p189, %p190
      %p192 = scmp.ne.s32.totalorder %s180, %s181
      %p193 = scmp.eq.s32.totalorder %s24, 1
      %p194 = por %p192, %p193
      %p196 = scmp.ne.s32.totalorder %s181, %s195
      %p197 = scmp.eq.s32.totalorder %s24, 0
      %p198 = por %p196, %p197
      %s200 = sadd.s32 %s199, 1
      %p203 = scmp.eq.s32.totalorder %s18, 1
      %p204 = scmp.ne.s32.totalorder %s199, %s201
      %p205 = scmp.eq.s32.totalorder %s18, 0
      %p206 = por %p204, %p205
      %p207 = scmp.ne.s32.totalorder %s199, %s201
      %p208 = scmp.eq.s32.totalorder %s23, 1
      %p209 = por %p207, %p208
      %p210 = scmp.ne.s32.totalorder %s201, %s202
      %p211 = scmp.eq.s32.totalorder %s23, 0
      %p212 = por %p210, %p211
      %p213 = scmp.ne.s32.totalorder %s201, %s202
      %p214 = scmp.eq.s32.totalorder %s24, 1
      %p215 = por %p213, %p214
      %p217 = scmp.ne.s32.totalorder %s202, %s216
      %p218 = scmp.eq.s32.totalorder %s24, 0
      %p219 = por %p217, %p218
      %s220 = ssub.s32 %s18, %s25
      %p221 = scmp.eq.s32.totalorder %s220, 0
      %s223 = sadd.s32 %s222, 1
      %s224 = scalar_select %p221, %s222, %s223
      %p227 = pneg %p221
      %p228 = scmp.eq.s32.totalorder %s18, 1
      %p229 = por %p227, %p228
      %p230 = scmp.ne.s32.totalorder %s222, %s225
      %p231 = scmp.eq.s32.totalorder %s18, 0
      %p232 = por %p230, %p231
      %p233 = scmp.ne.s32.totalorder %s222, %s225
      %p234 = scmp.eq.s32.totalorder %s23, 1
      %p235 = por %p233, %p234
      %p236 = scmp.ne.s32.totalorder %s225, %s226
      %p237 = scmp.eq.s32.totalorder %s23, 0
      %p238 = por %p236, %p237
      %p239 = scmp.ne.s32.totalorder %s225, %s226
      %p240 = scmp.eq.s32.totalorder %s24, 1
      %p241 = por %p239, %p240
      %p243 = scmp.ne.s32.totalorder %s226, %s242
      %p244 = scmp.eq.s32.totalorder %s24, 0
      %p245 = por %p243, %p244
      %p246 = scmp.le.s32.totalorder 1, %s18
      %p247 = scmp.lt.s32.totalorder %s18, 3
      %p248 = pnand %p246, %p247
      %p249 = pneg %p248
      // Predicated region
      $region9: #{mlp_forward.1} parent=5 // pred_check
        _
      $region10: #{mlp_forward.1} parent=5 // pred_check_branch
        %251 = sbr.rel (%p248) target = $region12
      $region11: #{mlp_forward.1} parent=5 // pred_region
        %s252 = ssub.s32 %s18, 1
        // Predicated region
        $region13: #{mlp_forward.1} parent=11 // pred_check
          %p253 = pneg %p65
        $region14: #{mlp_forward.1} parent=11 // pred_check_branch
          %255 = sbr.rel (%p253) target = $region16
        $region15: #{mlp_forward.1} parent=11 // pred_region
          _
        $region16: #{mlp_forward.1} parent=11 // pred_fallthru
          _
        // Predicated region
        $region17: #{mlp_forward.1} parent=11 // pred_check
          %p256 = pneg %p86
        $region18: #{mlp_forward.1} parent=11 // pred_check_branch
          %258 = sbr.rel (%p256) target = $region20
        $region19: #{mlp_forward.1} parent=11 // pred_region
          _
        $region20: #{mlp_forward.1} parent=11 // pred_fallthru
          _
        // Predicated region
        $region21: #{mlp_forward.1} parent=11 // pred_check
          %p259 = pneg %p107
        $region22: #{mlp_forward.1} parent=11 // pred_check_branch
          %261 = sbr.rel (%p259) target = $region24
        $region23: #{mlp_forward.1} parent=11 // pred_region
          _
        $region24: #{mlp_forward.1} parent=11 // pred_fallthru
          _
        // Predicated region
        $region25: #{mlp_forward.1} parent=11 // pred_check
          %p262 = pneg %p128
        $region26: #{mlp_forward.1} parent=11 // pred_check_branch
          %264 = sbr.rel (%p262) target = $region28
        $region27: #{mlp_forward.1} parent=11 // pred_region
          _
        $region28: #{mlp_forward.1} parent=11 // pred_fallthru
          _
        // Predicated region
        $region29: #{mlp_forward.1} parent=11 // pred_check
          %p265 = pneg %p149
        $region30: #{mlp_forward.1} parent=11 // pred_check_branch
          %267 = sbr.rel (%p265) target = $region32
        $region31: #{mlp_forward.1} parent=11 // pred_region
          _
        $region32: #{mlp_forward.1} parent=11 // pred_fallthru
          _
        // Predicated region
        $region33: #{mlp_forward.1} parent=11 // pred_check
          %p268 = pneg %p170
        $region34: #{mlp_forward.1} parent=11 // pred_check_branch
          %270 = sbr.rel (%p268) target = $region36
        $region35: #{mlp_forward.1} parent=11 // pred_region
          _
        $region36: #{mlp_forward.1} parent=11 // pred_fallthru
          _
        // Predicated region
        $region37: #{mlp_forward.1} parent=11 // pred_check
          %p271 = pneg %p191
        $region38: #{mlp_forward.1} parent=11 // pred_check_branch
          %273 = sbr.rel (%p271) target = $region40
        $region39: #{mlp_forward.1} parent=11 // pred_region
          _
        $region40: #{mlp_forward.1} parent=11 // pred_fallthru
          _
        // Predicated region
        $region41: #{mlp_forward.1} parent=11 // pred_check
          %p274 = pneg %p212
        $region42: #{mlp_forward.1} parent=11 // pred_check_branch
          %276 = sbr.rel (%p274) target = $region44
        $region43: #{mlp_forward.1} parent=11 // pred_region
          _
        $region44: #{mlp_forward.1} parent=11 // pred_fallthru
          _
      $region12: #{mlp_forward.1} parent=5 // pred_fallthru
        _
      %p277 = scmp.lt.s32.totalorder %s18, 2
      // Predicated region
      $region45: #{mlp_forward.1} parent=5 // pred_check
        %p278 = pneg %p277
      $region46: #{mlp_forward.1} parent=5 // pred_check_branch
        %280 = sbr.rel (%p278) target = $region48
      $region47: #{mlp_forward.1} parent=5 // pred_region
        // Predicated region
        $region49: #{mlp_forward.1} parent=47 // pred_check
          %p281 = pneg %p38
        $region50: #{mlp_forward.1} parent=47 // pred_check_branch
          %283 = sbr.rel (%p281) target = $region52
        $region51: #{mlp_forward.1} parent=47 // pred_region
          %s284 = sand.u32 %s28, 1
          %s285 = sand.u32 %s28, 1
          %s286 = smul.addr %s285, 16
          %s287 = scalar_lea.vmem [#allocation2], %s286
          %s288 = smul.u32 2, %s18
          %s289 = smul.addr %s288, 4
          %s290 = scalar_lea.vmem %s0, %s289
          // Predicated region
          $region53: #{mlp_forward.1} parent=51 // pred_check
            _
          $region54: #{mlp_forward.1} parent=51 // pred_check_branch
            %292 = sbr.rel (0) target = $region56
          $region55: #{mlp_forward.1} parent=51 // pred_region
            // Predicated region
            $region57: #{mlp_forward.1} parent=55 // pred_check
              _
            $region58: #{mlp_forward.1} parent=55 // pred_check_branch
              %294 = sbr.rel (0) target = $region60
            $region59: #{mlp_forward.1} parent=55 // pred_region
              // Predicated region
              $region72: #{mlp_forward.1} parent=59 // pred_check
                _
              $region73: #{mlp_forward.1} parent=59 // pred_check_branch
                %312 = sbr.rel (0) target = $region75
              $region74: #{mlp_forward.1} parent=59 // pred_region
                loop: start=0, step=1, limit=1
                $region76: #{mlp_forward.1} parent=74 // loop_pre_header
                  _
                $region77: #{mlp_forward.1} parent=74 // loop_header
                  %s314 = sphi 0, %s318
                  %p315 = scmp.ge.s32.totalorder %s314, 1
                  %s319 = sphi %s290, %s290
                  %s320 = sphi %s287, %s287
                $region78: #{mlp_forward.1} parent=74 // loop_header_branch
                  %317 = sbr.rel (%p315) target = $region82
                $region79: #{mlp_forward.1} parent=74 // loop_body
                  %v321 = vld [vmem:[%s319] sm:$0xff]
                  %322 = vst [vmem:[%s320] sm:$0xff] %v321
                  %v323 = vld [vmem:[%s319 + $0x10] sm:$0xff]
                  %324 = vst [vmem:[%s320 + $0x8] sm:$0xff] %v323
                $region80: #{mlp_forward.1} parent=74 // loop_footer
                  %s318 = sadd.s32 1, %s314
                $region81: #{mlp_forward.1} parent=74 // loop_footer_branch
                  %313 = sbr.rel target = $region77
                $region82: #{mlp_forward.1} parent=74 // loop_exit
                  _
              $region75: #{mlp_forward.1} parent=59 // pred_fallthru
                _
              // Predicated region
              $region83: #{mlp_forward.1} parent=59 // pred_check
                _
              $region84: #{mlp_forward.1} parent=59 // pred_check_branch
                %326 = sbr.rel target = $region86
              $region85: #{mlp_forward.1} parent=59 // pred_region
                _
              $region86: #{mlp_forward.1} parent=59 // pred_fallthru
                _
            $region60: #{mlp_forward.1} parent=55 // pred_fallthru
              _
            // Predicated region
            $region61: #{mlp_forward.1} parent=55 // pred_check
              _
            $region62: #{mlp_forward.1} parent=55 // pred_check_branch
              %296 = sbr.rel target = $region64
            $region63: #{mlp_forward.1} parent=55 // pred_region
              %s298 = ssub.s32 256, 1
              loop: start=0, step=1, limit=1
              $region65: #{mlp_forward.1} parent=63 // loop_pre_header
                _
              $region66: #{mlp_forward.1} parent=63 // loop_header
                %s300 = sphi 0, %s304
                %p301 = scmp.ge.s32.totalorder %s300, 1
                %s305 = sphi %s290, %s290
                %s306 = sphi %s287, %s287
              $region67: #{mlp_forward.1} parent=63 // loop_header_branch
                %303 = sbr.rel (%p301) target = $region71
              $region68: #{mlp_forward.1} parent=63 // loop_body
                %v307 = vld [vmem:[%s305] sm:%s298]
                %308 = vst [vmem:[%s306] sm:%s298] %v307
                %v309 = vld [vmem:[%s305 + $0x10] sm:%s298]
                %310 = vst [vmem:[%s306 + $0x8] sm:%s298] %v309
              $region69: #{mlp_forward.1} parent=63 // loop_footer
                %s304 = sadd.s32 1, %s300
              $region70: #{mlp_forward.1} parent=63 // loop_footer_branch
                %299 = sbr.rel target = $region66
              $region71: #{mlp_forward.1} parent=63 // loop_exit
                _
            $region64: #{mlp_forward.1} parent=55 // pred_fallthru
              _
          $region56: #{mlp_forward.1} parent=51 // pred_fallthru
            _
          %327 = vnop
        $region52: #{mlp_forward.1} parent=47 // pred_fallthru
          _
      $region48: #{mlp_forward.1} parent=5 // pred_fallthru
        _
      %p328 = scmp.le.s32.totalorder 1, %s18
      %p329 = scmp.lt.s32.totalorder %s18, 3
      %p330 = pnand %p328, %p329
      %p331 = pneg %p330
      // Predicated region
      $region87: #{mlp_forward.1} parent=5 // pred_check
        _
      $region88: #{mlp_forward.1} parent=5 // pred_check_branch
        %333 = sbr.rel (%p330) target = $region90
      $region89: #{mlp_forward.1} parent=5 // pred_region
        %s334 = ssub.s32 %s18, 1
        %s335 = sand.u32 %s31, 1
        %s336 = sand.u32 %s31, 1
        %s337 = smul.addr %s336, 16
        %s338 = scalar_lea.vmem [#allocation2], %s337
        // Predicated region
        $region91: #{mlp_forward.1} parent=89 // pred_check
          %p339 = pneg %p44
        $region92: #{mlp_forward.1} parent=89 // pred_check_branch
          %341 = sbr.rel (%p339) target = $region94
        $region93: #{mlp_forward.1} parent=89 // pred_region
          _
        $region94: #{mlp_forward.1} parent=89 // pred_fallthru
          _
        %s342 = sand.u32 %s31, 1
        %s343 = sand.u32 %s31, 1
        %s344 = smul.addr %s343, 16
        %s345 = scalar_lea.vmem [#allocation2], %s344
        %p346 = pneg %p44
        %p347 = pneg %p41
        %p348 = pneg %p65
        %p349 = pneg %p62
        %p350 = pneg %p86
        %p351 = pneg %p83
        %p352 = pneg %p107
        %p353 = pneg %p104
        %p354 = pneg %p128
        %p355 = pneg %p125
        %p356 = pneg %p149
        %p357 = pneg %p146
        %p358 = pneg %p170
        %p359 = pneg %p167
        %p360 = pneg %p191
        %p361 = pneg %p188
        %p362 = pneg %p212
        %p363 = pneg %p209
        %p364 = pneg %p238
        %p365 = pneg %p235
        %s366 = sand.u32 %s225, 1
        %s367 = scalar_lea.sflag [#allocation4], %s366
        %s368 = sand.u32 %s225, 1
        %s369 = smul.addr %s368, 16
        %s370 = scalar_lea.vmem [#allocation3], %s369
        %s371 = smul.u32 2, %s23
        %s372 = smul.u32 2, %s23
        %v374 = vld [vmem:[%s338] sm:$0xff]
        %v375 = vld [vmem:[%s338 + $0x8] sm:$0xff]
        %v376 = vld [vmem:[%s1] sm:$0xf]
        %v377 = vld [vmem:[%s1 + $0x4] sm:$0xf]
        %v378 = vld [vmem:[%s1 + $0x8] sm:$0xf]
        %v379 = vld [vmem:[%s1 + $0xc] sm:$0xf]
        %v380 = vld [vmem:[%s2] sm:$0xff]
        %v381 = vld [vmem:[%s2 + $0x8] sm:$0xff]
        %v382 = vld [vmem:[%s2 + $0x10] sm:$0xff]
        %v383 = vld [vmem:[%s2 + $0x18] sm:$0xff]
        %385 = vset.pattern.permute.xlu0 0
        %386 = vperm.xlu0 %385, %v380
        %v387 = vpop.permute.xlu0 %386
        %390 = vset.pattern.permute.xlu0 0
        %391 = vperm.xlu0 %390, %v381
        %v392 = vpop.permute.xlu0 %391
        %395 = vset.pattern.permute.xlu0 0
        %396 = vperm.xlu0 %395, %v382
        %v397 = vpop.permute.xlu0 %396
        %400 = vset.pattern.permute.xlu0 0
        %401 = vperm.xlu0 %400, %v383
        %v402 = vpop.permute.xlu0 %401
        %v408 = vunpack.c.l.b16 %v376
        %v409 = vunpack.c.l.b16 %v377
        %v410 = vunpack.c.l.b16 %v378
        %v411 = vunpack.c.l.b16 %v379
        %v412 = vpack.c.b16 %v409, %v408
        %v413 = vpack.c.b16 %v411, %v410
        %v416 = vunpack.c.l.b16 %v374
        %v417 = vunpack.c.h.b16 %v374
        %v418 = vunpack.c.l.b16 %v375
        %v419 = vunpack.c.h.b16 %v375
        %v420 = vpack.c.b16 %v418, %v416
        %v421 = vpack.c.b16 %v419, %v417
        %vm424 = vcmask 130048
        %v426 = vsel %vm424, %v412, 0
        %v429 = vsel %vm424, %v413, 0
        %431 = vmatprep.subr.bf16.mxu0 0
        %432 = vmatpush1.bf16.msra.mxu0 0
        %433 = vmatprep.subr.bf16.mxu0 0
        %434 = vmatpush1.bf16.msra.mxu0 0
        %435 = vmatprep.subr.bf16.mxu0 0
        %436 = vmatpush1.bf16.msra.mxu0 0
        %437 = vmatprep.subr.bf16.mxu0 0
        %438 = vmatpush1.bf16.msra.mxu0 0
        %439 = vmatprep.subr.bf16.mxu0 0
        %440 = vmatpush1.bf16.msra.mxu0 0
        %441 = vmatprep.subr.bf16.mxu0 0
        %442 = vmatpush1.bf16.msra.mxu0 0
        %443 = vmatprep.subr.bf16.mxu0 0
        %444 = vmatpush1.bf16.msra.mxu0 0
        %445 = vmatprep.subr.bf16.mxu0 %v421
        %446 = vmatpush1.bf16.msra.mxu0 %v420
        %447 = vmatprep.subr.bf16.mxu0 0
        %448 = vmatpush2.bf16.msra.mxu0 0
        %449 = vmatprep.subr.bf16.mxu0 0
        %450 = vmatpush2.bf16.msra.mxu0 0
        %451 = vmatprep.subr.bf16.mxu0 0
        %452 = vmatpush2.bf16.msra.mxu0 0
        %453 = vmatprep.subr.bf16.mxu0 0
        %454 = vmatpush2.bf16.msra.mxu0 0
        %455 = vmatprep.subr.bf16.mxu0 0
        %456 = vmatpush2.bf16.msra.mxu0 0
        %457 = vmatprep.subr.bf16.mxu0 0
        %458 = vmatpush2.bf16.msra.mxu0 0
        %459 = vmatprep.subr.bf16.mxu0 0
        %460 = vmatpush2.bf16.msra.mxu0 0
        %461 = vmatprep.subr.bf16.mxu0 0
        %462 = vmatpush2.bf16.msra.mxu0 0
        %463 = vmatprep.mubr.bf16.mxu0 0
        %464 = vmatmul.mubr.bf16.gmra.mxu0 %v426
        %v465 = vpop.f32.mrf.mxu0
        %v466 = vadd.f32 %v387, %v465
        %v467 = vpop.f32.mrf.mxu0
        %v468 = vadd.f32 %v387, %v467
        %v469 = vpop.f32.mrf.mxu0
        %v470 = vadd.f32 %v392, %v469
        %v471 = vpop.f32.mrf.mxu0
        %v472 = vadd.f32 %v392, %v471
        %473 = vmatprep.mubr.bf16.mxu0 0
        %474 = vmatmul.mubr.bf16.gmra.mxu0 %v429
        %v475 = vpop.f32.mrf.mxu0
        %v476 = vadd.f32 %v397, %v475
        %v477 = vpop.f32.mrf.mxu0
        %v478 = vadd.f32 %v397, %v477
        %v479 = vpop.f32.mrf.mxu0
        %v480 = vadd.f32 %v402, %v479
        %v481 = vpop.f32.mrf.mxu0
        %v482 = vadd.f32 %v402, %v481
        %483 = vdwg.mxu0
        %v484 = vmax.f32 %v466, 0.0
        %v485 = vmax.f32 %v468, 0.0
        %v486 = vmax.f32 %v470, 0.0
        %v487 = vmax.f32 %v472, 0.0
        %v488 = vmax.f32 %v476, 0.0
        %v489 = vmax.f32 %v478, 0.0
        %v490 = vmax.f32 %v480, 0.0
        %v491 = vmax.f32 %v482, 0.0
        %v492 = vld [vmem:[%s3] sm:$0xf]
        %v493 = vld [vmem:[%s3 + $0x4] sm:$0xf]
        %v494 = vld [vmem:[%s3 + $0x8] sm:$0xf]
        %v495 = vld [vmem:[%s3 + $0xc] sm:$0xf]
        %v496 = vld [vmem:[%s4] sm:$0xff]
        %v497 = vld [vmem:[%s4 + $0x8] sm:$0xff]
        %v498 = vld [vmem:[%s4 + $0x10] sm:$0xff]
        %v499 = vld [vmem:[%s4 + $0x18] sm:$0xff]
        %v500 = vpack.c.bf16 %v486, %v484
        %v501 = vpack.c.bf16 %v487, %v485
        %v502 = vpack.c.bf16 %v490, %v488
        %v503 = vpack.c.bf16 %v491, %v489
        %505 = vset.pattern.permute.xlu0 0
        %506 = vperm.xlu0 %505, %v496
        %v507 = vpop.permute.xlu0 %506
        %510 = vset.pattern.permute.xlu0 0
        %511 = vperm.xlu0 %510, %v497
        %v512 = vpop.permute.xlu0 %511
        %515 = vset.pattern.permute.xlu0 0
        %516 = vperm.xlu0 %515, %v498
        %v517 = vpop.permute.xlu0 %516
        %520 = vset.pattern.permute.xlu0 0
        %521 = vperm.xlu0 %520, %v499
        %v522 = vpop.permute.xlu0 %521
        %v528 = vunpack.c.l.b16 %v492
        %v529 = vunpack.c.l.b16 %v493
        %v530 = vunpack.c.l.b16 %v494
        %v531 = vunpack.c.l.b16 %v495
        %v532 = vpack.c.b16 %v529, %v528
        %v533 = vpack.c.b16 %v531, %v530
        %vm534 = vcmask 261120
        %v536 = vsel %vm534, %v532, 0
        %v539 = vsel %vm534, %v533, 0
        %541 = vmatprep.subr.bf16.mxu0 0
        %542 = vmatpush1.bf16.msra.mxu0 0
        %543 = vmatprep.subr.bf16.mxu0 0
        %544 = vmatpush1.bf16.msra.mxu0 0
        %545 = vmatprep.subr.bf16.mxu0 0
        %546 = vmatpush1.bf16.msra.mxu0 0
        %547 = vmatprep.subr.bf16.mxu0 0
        %548 = vmatpush1.bf16.msra.mxu0 0
        %549 = vmatprep.subr.bf16.mxu0 0
        %550 = vmatpush1.bf16.msra.mxu0 0
        %551 = vmatprep.subr.bf16.mxu0 0
        %552 = vmatpush1.bf16.msra.mxu0 0
        %553 = vmatprep.subr.bf16.mxu0 %v503
        %554 = vmatpush1.bf16.msra.mxu0 %v502
        %555 = vmatprep.subr.bf16.mxu0 %v501
        %556 = vmatpush1.bf16.msra.mxu0 %v500
        %557 = vmatprep.subr.bf16.mxu0 0
        %558 = vmatpush2.bf16.msra.mxu0 0
        %559 = vmatprep.subr.bf16.mxu0 0
        %560 = vmatpush2.bf16.msra.mxu0 0
        %561 = vmatprep.subr.bf16.mxu0 0
        %562 = vmatpush2.bf16.msra.mxu0 0
        %563 = vmatprep.subr.bf16.mxu0 0
        %564 = vmatpush2.bf16.msra.mxu0 0
        %565 = vmatprep.subr.bf16.mxu0 0
        %566 = vmatpush2.bf16.msra.mxu0 0
        %567 = vmatprep.subr.bf16.mxu0 0
        %568 = vmatpush2.bf16.msra.mxu0 0
        %569 = vmatprep.subr.bf16.mxu0 0
        %570 = vmatpush2.bf16.msra.mxu0 0
        %571 = vmatprep.subr.bf16.mxu0 0
        %572 = vmatpush2.bf16.msra.mxu0 0
        %573 = vmatprep.mubr.bf16.mxu0 0
        %574 = vmatmul.mubr.bf16.gmra.mxu0 %v536
        %v575 = vpop.f32.mrf.mxu0
        %v576 = vadd.f32 %v507, %v575
        %v577 = vpop.f32.mrf.mxu0
        %v578 = vadd.f32 %v507, %v577
        %v579 = vpop.f32.mrf.mxu0
        %v580 = vadd.f32 %v512, %v579
        %v581 = vpop.f32.mrf.mxu0
        %v582 = vadd.f32 %v512, %v581
        %583 = vmatprep.mubr.bf16.mxu0 0
        %584 = vmatmul.mubr.bf16.gmra.mxu0 %v539
        %v585 = vpop.f32.mrf.mxu0
        %v586 = vadd.f32 %v517, %v585
        %v587 = vpop.f32.mrf.mxu0
        %v588 = vadd.f32 %v517, %v587
        %v589 = vpop.f32.mrf.mxu0
        %v590 = vadd.f32 %v522, %v589
        %v591 = vpop.f32.mrf.mxu0
        %v592 = vadd.f32 %v522, %v591
        %593 = vdwg.mxu0
        %v594 = vmax.f32 %v576, 0.0
        %v595 = vmax.f32 %v578, 0.0
        %v596 = vmax.f32 %v580, 0.0
        %v597 = vmax.f32 %v582, 0.0
        %v598 = vmax.f32 %v586, 0.0
        %v599 = vmax.f32 %v588, 0.0
        %v600 = vmax.f32 %v590, 0.0
        %v601 = vmax.f32 %v592, 0.0
        %v602 = vld [vmem:[%s5] sm:$0xf]
        %v603 = vld [vmem:[%s5 + $0x4] sm:$0xf]
        %v604 = vld [vmem:[%s5 + $0x8] sm:$0xf]
        %v605 = vld [vmem:[%s5 + $0xc] sm:$0xf]
        %v606 = vld [vmem:[%s6] sm:$0xff]
        %v607 = vld [vmem:[%s6 + $0x8] sm:$0xff]
        %v608 = vld [vmem:[%s6 + $0x10] sm:$0xff]
        %v609 = vld [vmem:[%s6 + $0x18] sm:$0xff]
        %v610 = vpack.c.bf16 %v596, %v594
        %v611 = vpack.c.bf16 %v597, %v595
        %v612 = vpack.c.bf16 %v600, %v598
        %v613 = vpack.c.bf16 %v601, %v599
        %615 = vset.pattern.permute.xlu0 0
        %616 = vperm.xlu0 %615, %v606
        %v617 = vpop.permute.xlu0 %616
        %620 = vset.pattern.permute.xlu0 0
        %621 = vperm.xlu0 %620, %v607
        %v622 = vpop.permute.xlu0 %621
        %625 = vset.pattern.permute.xlu0 0
        %626 = vperm.xlu0 %625, %v608
        %v627 = vpop.permute.xlu0 %626
        %630 = vset.pattern.permute.xlu0 0
        %631 = vperm.xlu0 %630, %v609
        %v632 = vpop.permute.xlu0 %631
        %v638 = vunpack.c.l.b16 %v602
        %v639 = vunpack.c.l.b16 %v603
        %v640 = vunpack.c.l.b16 %v604
        %v641 = vunpack.c.l.b16 %v605
        %v642 = vpack.c.b16 %v639, %v638
        %v643 = vpack.c.b16 %v641, %v640
        %v645 = vsel %vm534, %v642, 0
        %v648 = vsel %vm534, %v643, 0
        %650 = vmatprep.subr.bf16.mxu0 0
        %651 = vmatpush1.bf16.msra.mxu0 0
        %652 = vmatprep.subr.bf16.mxu0 0
        %653 = vmatpush1.bf16.msra.mxu0 0
        %654 = vmatprep.subr.bf16.mxu0 0
        %655 = vmatpush1.bf16.msra.mxu0 0
        %656 = vmatprep.subr.bf16.mxu0 0
        %657 = vmatpush1.bf16.msra.mxu0 0
        %658 = vmatprep.subr.bf16.mxu0 0
        %659 = vmatpush1.bf16.msra.mxu0 0
        %660 = vmatprep.subr.bf16.mxu0 0
        %661 = vmatpush1.bf16.msra.mxu0 0
        %662 = vmatprep.subr.bf16.mxu0 %v613
        %663 = vmatpush1.bf16.msra.mxu0 %v612
        %664 = vmatprep.subr.bf16.mxu0 %v611
        %665 = vmatpush1.bf16.msra.mxu0 %v610
        %666 = vmatprep.subr.bf16.mxu0 0
        %667 = vmatpush2.bf16.msra.mxu0 0
        %668 = vmatprep.subr.bf16.mxu0 0
        %669 = vmatpush2.bf16.msra.mxu0 0
        %670 = vmatprep.subr.bf16.mxu0 0
        %671 = vmatpush2.bf16.msra.mxu0 0
        %672 = vmatprep.subr.bf16.mxu0 0
        %673 = vmatpush2.bf16.msra.mxu0 0
        %674 = vmatprep.subr.bf16.mxu0 0
        %675 = vmatpush2.bf16.msra.mxu0 0
        %676 = vmatprep.subr.bf16.mxu0 0
        %677 = vmatpush2.bf16.msra.mxu0 0
        %678 = vmatprep.subr.bf16.mxu0 0
        %679 = vmatpush2.bf16.msra.mxu0 0
        %680 = vmatprep.subr.bf16.mxu0 0
        %681 = vmatpush2.bf16.msra.mxu0 0
        %682 = vmatprep.mubr.bf16.mxu0 0
        %683 = vmatmul.mubr.bf16.gmra.mxu0 %v645
        %v684 = vpop.f32.mrf.mxu0
        %v685 = vadd.f32 %v617, %v684
        %v686 = vpop.f32.mrf.mxu0
        %v687 = vadd.f32 %v617, %v686
        %v688 = vpop.f32.mrf.mxu0
        %v689 = vadd.f32 %v622, %v688
        %v690 = vpop.f32.mrf.mxu0
        %v691 = vadd.f32 %v622, %v690
        %692 = vmatprep.mubr.bf16.mxu0 0
        %693 = vmatmul.mubr.bf16.gmra.mxu0 %v648
        %v694 = vpop.f32.mrf.mxu0
        %v695 = vadd.f32 %v627, %v694
        %v696 = vpop.f32.mrf.mxu0
        %v697 = vadd.f32 %v627, %v696
        %v698 = vpop.f32.mrf.mxu0
        %v699 = vadd.f32 %v632, %v698
        %v700 = vpop.f32.mrf.mxu0
        %v701 = vadd.f32 %v632, %v700
        %702 = vdwg.mxu0
        %v703 = vmax.f32 %v685, 0.0
        %v704 = vmax.f32 %v687, 0.0
        %v705 = vmax.f32 %v689, 0.0
        %v706 = vmax.f32 %v691, 0.0
        %v707 = vmax.f32 %v695, 0.0
        %v708 = vmax.f32 %v697, 0.0
        %v709 = vmax.f32 %v699, 0.0
        %v710 = vmax.f32 %v701, 0.0
        %v711 = vld [vmem:[%s7] sm:$0xf]
        %v712 = vld [vmem:[%s8] sm:$0xff]
        %v713 = vpack.c.bf16 %v705, %v703
        %v714 = vpack.c.bf16 %v706, %v704
        %v715 = vpack.c.bf16 %v709, %v707
        %v716 = vpack.c.bf16 %v710, %v708
        %718 = vset.pattern.permute.xlu0 0
        %719 = vperm.xlu0 %718, %v712
        %v720 = vpop.permute.xlu0 %719
        %v723 = vsel %vm534, %v711, 0
        %725 = vmatprep.subr.bf16.mxu0 0
        %726 = vmatpush1.bf16.msra.mxu0 0
        %727 = vmatprep.subr.bf16.mxu0 0
        %728 = vmatpush1.bf16.msra.mxu0 0
        %729 = vmatprep.subr.bf16.mxu0 0
        %730 = vmatpush1.bf16.msra.mxu0 0
        %731 = vmatprep.subr.bf16.mxu0 0
        %732 = vmatpush1.bf16.msra.mxu0 0
        %733 = vmatprep.subr.bf16.mxu0 0
        %734 = vmatpush1.bf16.msra.mxu0 0
        %735 = vmatprep.subr.bf16.mxu0 0
        %736 = vmatpush1.bf16.msra.mxu0 0
        %737 = vmatprep.subr.bf16.mxu0 %v716
        %738 = vmatpush1.bf16.msra.mxu0 %v715
        %739 = vmatprep.subr.bf16.mxu0 %v714
        %740 = vmatpush1.bf16.msra.mxu0 %v713
        %741 = vmatprep.subr.bf16.mxu0 0
        %742 = vmatpush2.bf16.msra.mxu0 0
        %743 = vmatprep.subr.bf16.mxu0 0
        %744 = vmatpush2.bf16.msra.mxu0 0
        %745 = vmatprep.subr.bf16.mxu0 0
        %746 = vmatpush2.bf16.msra.mxu0 0
        %747 = vmatprep.subr.bf16.mxu0 0
        %748 = vmatpush2.bf16.msra.mxu0 0
        %749 = vmatprep.subr.bf16.mxu0 0
        %750 = vmatpush2.bf16.msra.mxu0 0
        %751 = vmatprep.subr.bf16.mxu0 0
        %752 = vmatpush2.bf16.msra.mxu0 0
        %753 = vmatprep.subr.bf16.mxu0 0
        %754 = vmatpush2.bf16.msra.mxu0 0
        %755 = vmatprep.subr.bf16.mxu0 0
        %756 = vmatpush2.bf16.msra.mxu0 0
        %757 = vmatprep.mubr.bf16.mxu0 0
        %758 = vmatmul.mubr.bf16.gmra.mxu0 %v723
        %v759 = vpop.f32.mrf.mxu0
        %v760 = vadd.f32 %v720, %v759
        %v761 = vpop.f32.mrf.mxu0
        %v762 = vadd.f32 %v720, %v761
        %v763 = vpop.f32.mrf.mxu0
        %v764 = vpop.f32.mrf.mxu0
        %765 = vdwg.mxu0
        %766 = vst [vmem:[%s370] sm:$0xff] %v760
        %767 = vst [vmem:[%s370 + $0x8] sm:$0xff] %v762
        %s768 = sand.u32 %s225, 1
        %s769 = scalar_lea.sflag [#allocation4], %s768
        %s770 = sand.u32 %s225, 1
        %s771 = smul.addr %s770, 16
        %s772 = scalar_lea.vmem [#allocation3], %s771
        // Predicated region
        $region95: #{mlp_forward.1} parent=89 // pred_check
          %p773 = pneg %p235
        $region96: #{mlp_forward.1} parent=89 // pred_check_branch
          %775 = sbr.rel (%p773) target = $region98
        $region97: #{mlp_forward.1} parent=89 // pred_region
          %s776 = smul.u32 2, %s23
          %s778 = ssub.s32 256, 256
          %779 = vsyncadd %s769, %s778
          %s780 = smul.addr %s776, 128
          %s781 = scalar_lea.hbm %s9, %s780
          %s783 = sshll.u32 %s772, 4
          %s784 = int_to_ptr.vmem [resolvable:$true] %s783
          %786 = dma.vmem_to_hbm [thread:$0]  %s784, 256, %s781, %s769
        $region98: #{mlp_forward.1} parent=89 // pred_fallthru
          _
      $region90: #{mlp_forward.1} parent=5 // pred_fallthru
        _
      %p787 = scmp.le.s32.totalorder 2, %s18
      // Predicated region
      $region99: #{mlp_forward.1} parent=5 // pred_check
        %p788 = pneg %p787
      $region100: #{mlp_forward.1} parent=5 // pred_check_branch
        %790 = sbr.rel (%p788) target = $region102
      $region101: #{mlp_forward.1} parent=5 // pred_region
        %s791 = ssub.s32 %s18, 2
        // Predicated region
        $region103: #{mlp_forward.1} parent=101 // pred_check
          %p792 = pneg %p241
        $region104: #{mlp_forward.1} parent=101 // pred_check_branch
          %794 = sbr.rel (%p792) target = $region106
        $region105: #{mlp_forward.1} parent=101 // pred_region
          %s795 = sand.u32 %s226, 1
          %s796 = scalar_lea.sflag [#allocation4], %s795
          %s797 = sand.u32 %s226, 1
          %s798 = smul.addr %s797, 16
          %s799 = scalar_lea.vmem [#allocation3], %s798
          %800 = dma.done %s796, 256
        $region106: #{mlp_forward.1} parent=101 // pred_fallthru
          _
      $region102: #{mlp_forward.1} parent=5 // pred_fallthru
        _
    $region6: #{mlp_forward.1} parent=1 // loop_footer
      %s22 = sadd.s32 1, %s18
    $region7: #{mlp_forward.1} parent=1 // loop_footer_branch
      %17 = sbr.rel target = $region3
    $region8: #{mlp_forward.1} parent=1 // loop_exit
      _
    %801 = vsyncpa [#allocation4], 1
    %s802 = scalar_lea.sflag [#allocation4], 1
    %803 = vsyncpa %s802, 1

</llo_original>
